<compile_context>
chip_gen: v5e
topology: v5e:2x2
jax: 0.10.0
libtpu: 0.0.40
codegen_flags: <defaults>
</compile_context>

<pallas_src>
import functools
import math

import jax
import jax.numpy as jnp
from jax.experimental import pallas as pl
from jax.experimental.pallas import tpu as pltpu


def _largest_divisor(n, *, multiple_of=1, cap=None):
    best = None
    for d in range(1, n + 1):
        if n % d:
            continue
        if d % multiple_of:
            continue
        if cap is not None and d > cap:
            continue
        best = d
    return best


def _vmem_capacity_bytes():
    try:
        info = pltpu.get_tpu_info()
        for name in ("vmem_capacity_bytes", "vmem_bytes", "vmem_capacity"):
            cap = getattr(info, name, None)
            if cap:
                return int(cap)
    except Exception:
        pass
    # Conservative fallback: smallest per-TC VMEM across supported generations (v7x = 64 MiB),
    # so a v5e/v6e-tuned budget never exceeds v7x physical VMEM.
    return 64 * 1024 * 1024


def _masked_l2_ndvi_kernel(targ_ref, pred_ref, mask_ref, lc_ref, out_ref, *scratch,
                           lc_min, lc_max, scale_by_std, weight_by_std, pred_mask_value):
    k = pl.program_id(2)
    nk = pl.num_programs(2)
    need_std = scale_by_std or weight_by_std
    use_pred_mask = pred_mask_value is not None

    sse_acc, msum_acc = scratch[0], scratch[1]
    nxt = 2
    if need_std:
        stm_acc, st2m_acc = scratch[nxt], scratch[nxt + 1]
        nxt += 2
    if use_pred_mask:
        pany_acc = scratch[nxt]

    @pl.when(k == 0)
    def _init():
        zeros = jnp.zeros_like(sse_acc)
        sse_acc[...] = zeros
        msum_acc[...] = zeros
        if need_std:
            stm_acc[...] = zeros
            st2m_acc[...] = zeros
        if use_pred_mask:
            pany_acc[...] = zeros

    # (tt, th, W) blocks.  Subtraction in native dtype (bf16 stays bf16 on the VPU), widen only
    # for the f32 accumulation; mask is read at its stored width.
    targ = targ_ref[...]
    pred = pred_ref[...]
    valid = mask_ref[...].astype(jnp.float32) < 1.0

    diff = jnp.where(valid, (targ - pred).astype(jnp.float32), 0.0)
    sse_acc[...] += jnp.sum(diff * diff, axis=0)
    msum_acc[...] += jnp.sum(valid.astype(jnp.float32), axis=0)
    if need_std:
        tm = jnp.where(valid, targ.astype(jnp.float32), 0.0)
        stm_acc[...] += jnp.sum(tm, axis=0)
        st2m_acc[...] += jnp.sum(tm * tm, axis=0)
    if use_pred_mask:
        pany_acc[...] = jnp.maximum(
            pany_acc[...],
            jnp.max((pred != pred_mask_value).astype(jnp.float32), axis=0))

    @pl.when(k == nk - 1)
    def _finalize():
        sse = sse_acc[...]
        msum = msum_acc[...]
        mse = sse / (msum + 1e-8)
        if need_std:
            stm = stm_acc[...]
            st2m = st2m_acc[...]
            mean = stm / (msum + 1e-8)
            # single-pass sum(((targ - mean) * m)^2), clamped at 0 for numerical safety
            ssd = jnp.maximum(st2m - 2.0 * mean * stm + mean * mean * msum, 0.0)
            if scale_by_std:
                mse = sse / jnp.clip(ssd, 0.01, None)
            else:  # weight_by_std multiplies the raw SSE, matching the PyTorch forward
                w = jnp.clip(jnp.sqrt(ssd / (msum + 1e-8)) / 0.1, 0.01, 100.0)
                mse = sse * w

        lc = lc_ref[...].astype(jnp.float32)                        # (th, W)
        lc_mask = jnp.logical_and(lc >= lc_min, lc <= lc_max).astype(jnp.float32)
        if use_pred_mask:
            w_mask = lc_mask * pany_acc[...]
        else:
            w_mask = lc_mask

        num = jnp.sum(mse * w_mask)
        den = jnp.sum(w_mask)
        out_ref[0:1, :] = jnp.full((1, 128), num, dtype=jnp.float32)
        out_ref[1:2, :] = jnp.full((1, 128), den, dtype=jnp.float32)


def masked_l2_ndvi_loss(preds, batch, aux, args):
    """Pallas-backed equivalent of MaskedL2NDVILoss.forward."""
    T = int(args['target_length'])
    targ_idx = int(args['ndvi_targ_idx'])
    pred_idx = int(args['ndvi_pred_idx'])

    dyn = batch['dynamic'][0]            # (B, Td, C_dyn, H, W)
    dyn_mask = batch['dynamic_mask'][0]  # (B, Tm, 1, H, W)
    lc = batch['landcover']              # (B, 1, H, W)

    if dyn_mask.shape[2] != 1:
        # TODO(synk): multi-channel dynamic_mask broadcast is not implemented in the kernel.
        raise NotImplementedError('dynamic_mask is assumed to have a single channel')

    B, Td, _, H, W = dyn.shape
    Tp = preds.shape[1]
    Tm = dyn_mask.shape[1]
    dyn_off, pred_off, mask_off = Td - T, Tp - T, Tm - T

    scale_by_std = bool(args.get('scale_by_std') or False)
    weight_by_std = bool(args.get('weight_by_std') or False)
    need_std = scale_by_std or weight_by_std
    pmv = args.get('pred_mask_value', None)
    use_pred_mask = bool(pmv)            # PyTorch truthiness: None / 0 disable the pred mask

    # ----------------- VMEM-budget-driven tile selection -----------------
    vmem_cap = _vmem_capacity_bytes()
    vmem_limit = int(min(vmem_cap * 3 // 4, 96 * 1024 * 1024))   # 96 MiB v5e/v6e, ~48 MiB v7x

    in_itemsize = max(dyn.dtype.itemsize, preds.dtype.itemsize, dyn_mask.dtype.itemsize)
    # dtype-aware sublane multiple: 8 for 32-bit, 16 for 16-bit, 32 for 8-bit inputs
    sub_mult = 8
    for isz in (dyn.dtype.itemsize, preds.dtype.itemsize, dyn_mask.dtype.itemsize,
                lc.dtype.itemsize):
        if isz < 4:
            sub_mult = max(sub_mult, 8 * (4 // isz))

    n_slabs = 2 + (2 if need_std else 0) + (1 if use_pred_mask else 0)

    # spatial-row tile: keep the per-pixel f32 scratch slabs within ~1/4 of the budget
    slab_budget = vmem_limit // 4
    cap_rows = max(sub_mult, slab_budget // max(1, n_slabs * W * 4))
    if H % sub_mult == 0:
        th = _largest_divisor(H, multiple_of=sub_mult, cap=cap_rows) or H
    else:
        th = H                                                   # full-dim block is always legal
    num_h = H // th

    # megacore occupancy (v7x has 2 TCs): make the parallel extent >= 2 when possible
    if B * num_h < 2 and H > sub_mult:
        for m in (sub_mult, 8):
            cand = None
            for d in range(H // 2, 0, -1):
                if H % d == 0 and d % m == 0:
                    cand = d
                    break
            if cand:
                th, num_h = cand, H // cand
                break

    # time-chunk size from the remaining budget: 3 time-varying inputs x 2 pipeline buffers
    scratch_bytes = n_slabs * th * W * 4
    lc_bytes = 2 * th * W * lc.dtype.itemsize
    out_bytes = 2 * 2 * 128 * 4
    headroom = 2 * 1024 * 1024
    remaining = max(th * W * in_itemsize,
                    vmem_limit - scratch_bytes - lc_bytes - out_bytes - headroom)
    per_input = max(th * W * in_itemsize, remaining // (3 * 2))
    cap_t = max(1, per_input // (th * W * in_itemsize))

    tt_free = _largest_divisor(T, cap=cap_t) or 1
    g = functools.reduce(math.gcd, (dyn_off, pred_off, mask_off), T)
    tt_zero = _largest_divisor(max(1, g), cap=cap_t) or 1
    # zero-copy (index-map) time slicing when the offsets do not collapse the chunk size;
    # otherwise one cheap wrapper-side channel slice per stream beats per-frame grid steps.
    use_zero_copy = tt_zero * 2 >= tt_free
    tt = tt_zero if use_zero_copy else tt_free

    grid = (B, num_h, T // tt)

    kernel = functools.partial(
        _masked_l2_ndvi_kernel,
        lc_min=float(args['lc_min']),
        lc_max=float(args['lc_max']),
        scale_by_std=scale_by_std,
        weight_by_std=weight_by_std,
        pred_mask_value=(float(pmv) if use_pred_mask else None),
    )

    # deep pipelining only when per-step blocks are small (DMA-issue-latency bound)
    deep_buffer = (tt * th * W * in_itemsize) <= (256 * 1024)

    def _time_spec(block_shape, index_map, buffered):
        if buffered:
            try:
                return pl.BlockSpec(block_shape, index_map, pipeline_mode=pl.Buffered(3))
            except TypeError:
                pass
        return pl.BlockSpec(block_shape, index_map)

    lc_spec = pl.BlockSpec((None, None, th, W), lambda b, h, k: (b, 0, h, 0))
    out_spec = pl.BlockSpec((None, None, 2, 128), lambda b, h, k: (b, h, 0, 0))

    scratch_shapes = [pltpu.VMEM((th, W), jnp.float32),          # sum of squared errors
                      pltpu.VMEM((th, W), jnp.float32)]          # mask count
    if need_std:
        scratch_shapes += [pltpu.VMEM((th, W), jnp.float32),     # sum targ*mask
                           pltpu.VMEM((th, W), jnp.float32)]     # sum targ^2*mask
    if use_pred_mask:
        scratch_shapes += [pltpu.VMEM((th, W), jnp.float32)]     # pred-mask "any over time"

    if use_zero_copy:
        dyn_t0, pred_t0, mask_t0 = dyn_off // tt, pred_off // tt, mask_off // tt
        operands = (dyn, preds, dyn_mask, lc)

        def make_in_specs(buffered):
            return [
                _time_spec((None, tt, None, th, W),
                           lambda b, h, k: (b, dyn_t0 + k, targ_idx, h, 0), buffered),
                _time_spec((None, tt, None, th, W),
                           lambda b, h, k: (b, pred_t0 + k, pred_idx, h, 0), buffered),
                _time_spec((None, tt, None, th, W),
                           lambda b, h, k: (b, mask_t0 + k, 0, h, 0), buffered),
                lc_spec,
            ]
    else:
        # offsets incompatible with large time chunks: one (B,T,H,W) channel slice per stream
        targ_arr = dyn[:, dyn_off:, targ_idx]
        pred_arr = preds[:, pred_off:, pred_idx]
        mask_arr = dyn_mask[:, mask_off:, 0]
        operands = (targ_arr, pred_arr, mask_arr, lc)

        def make_in_specs(buffered):
            return [
                _time_spec((None, tt, th, W), lambda b, h, k: (b, k, h, 0), buffered),
                _time_spec((None, tt, th, W), lambda b, h, k: (b, k, h, 0), buffered),
                _time_spec((None, tt, th, W), lambda b, h, k: (b, k, h, 0), buffered),
                lc_spec,
            ]

    def run(buffered):
        return pl.pallas_call(
            kernel,
            out_shape=jax.ShapeDtypeStruct((B, num_h, 2, 128), jnp.float32),
            grid_spec=pltpu.PrefetchScalarGridSpec(
                num_scalar_prefetch=0,
                grid=grid,
                in_specs=make_in_specs(buffered),
                out_specs=out_spec,
                scratch_shapes=scratch_shapes,
            ),
            compiler_params=pltpu.CompilerParams(
                dimension_semantics=("parallel", "parallel", "arbitrary"),
                vmem_limit_bytes=vmem_limit,
            ),
        )(*operands)

    if deep_buffer:
        try:
            partials = run(True)
        except Exception:
            partials = run(False)
    else:
        partials = run(False)

    num = jnp.sum(partials[:, :, 0, 0])
    den = jnp.sum(partials[:, :, 1, 0])
    mse_lc = num / (den + 1e-8)

    logs = {'loss': mse_lc}
    if args.get('decouple_loss_term'):
        # TODO(synk): decouple_loss_term path is plain-JAX glue (aux lookup), not in the kernel.
        extra_loss = aux[args['decouple_loss_term']]
        logs['mse_lc'] = mse_lc
        logs[args['decouple_loss_term']] = extra_loss
        mse_lc = mse_lc + args['decouple_loss_weight'] * extra_loss
        logs['loss'] = mse_lc
    return mse_lc, logs


def _reference_loss(preds, batch, args):
    """Plain-JAX reference mirroring the PyTorch forward (all branches)."""
    T = args['target_length']
    s2_mask = (batch['dynamic_mask'][0][:, -T:] < 1.0).astype(jnp.float32)          # (B,T,1,H,W)
    lc = batch['landcover']
    lc_mask = ((lc >= args['lc_min']) & (lc <= args['lc_max'])).astype(jnp.float32)  # (B,1,H,W)
    ndvi_targ = batch['dynamic'][0][:, -T:, args['ndvi_targ_idx']][:, :, None]       # (B,T,1,H,W)
    ndvi_pred = preds[:, -T:, args['ndvi_pred_idx']][:, :, None]                     # (B,T,1,H,W)
    sse = (((ndvi_targ - ndvi_pred) * s2_mask) ** 2).sum(1)                          # (B,1,H,W)
    msum = s2_mask.sum(1)
    mse = sse / (msum + 1e-8)
    if args.get('scale_by_std'):
        mean = (ndvi_targ * s2_mask).sum(1, keepdims=True) / (s2_mask.sum(1, keepdims=True) + 1e-8)
        ssd = (((ndvi_targ - mean) * s2_mask) ** 2).sum(1)
        mse = sse / jnp.clip(ssd, 0.01, None)
    elif args.get('weight_by_std'):
        mean = (ndvi_targ * s2_mask).sum(1, keepdims=True) / (s2_mask.sum(1, keepdims=True) + 1e-8)
        ssd = (((ndvi_targ - mean) * s2_mask) ** 2).sum(1)
        mse = sse * jnp.clip(jnp.sqrt(ssd / (msum + 1e-8)) / 0.1, 0.01, 100.0)
    pmv = args.get('pred_mask_value', None)
    if pmv:
        pred_mask = (ndvi_pred != pmv).astype(jnp.float32).max(1)                    # (B,1,H,W)
        return (mse * lc_mask * pred_mask).sum() / ((lc_mask * pred_mask).sum() + 1e-8)
    return (mse * lc_mask).sum() / (lc_mask.sum() + 1e-8)


if __name__ == "__main__":
    key = jax.random.PRNGKey(0)
    k1, k2, k3, k4, k5, k6 = jax.random.split(key, 6)

    B, T, C_dyn, C_pred, H, W = 2, 8, 3, 2, 16, 16

    base_args = {
        'lc_min': 20.0,
        'lc_max': 80.0,
        'target_length': T,
        'ndvi_pred_idx': 0,
        'ndvi_targ_idx': 1,
    }

    preds = jax.random.normal(k1, (B, T, C_pred, H, W), dtype=jnp.float32)
    landcover = jnp.floor(jax.random.uniform(k4, (B, 1, H, W), dtype=jnp.float32) * 100.0)

    # Batch A: time offsets divisible by the chunk size -> zero-copy index-map time slicing.
    Td_a = 16
    dyn_a = jax.random.normal(k2, (B, Td_a, C_dyn, H, W), dtype=jnp.float32)
    mask_a = jax.random.uniform(k3, (B, Td_a, 1, H, W), dtype=jnp.float32) * 2.0
    batch_a = {'dynamic': [dyn_a], 'dynamic_mask': [mask_a], 'landcover': landcover}

    # Batch B: offsets of 2 frames collapse the zero-copy chunk -> wrapper-side channel slice;
    # also uses a uint8 mask to exercise the narrow-dtype mask read.
    Td_b = 10
    dyn_b = jax.random.normal(k5, (B, Td_b, C_dyn, H, W), dtype=jnp.float32)
    mask_b = (jax.random.uniform(k6, (B, Td_b, 1, H, W), dtype=jnp.float32) * 2.0).astype(jnp.uint8)
    batch_b = {'dynamic': [dyn_b], 'dynamic_mask': [mask_b], 'landcover': landcover}

    aux = {}

    PMV = -1.0
    preds_masked = preds.at[:, :, base_args['ndvi_pred_idx'], :4, :4].set(PMV)

    configs = [
        ({}, preds),
        ({'scale_by_std': True}, preds),
        ({'weight_by_std': True}, preds),
        ({'pred_mask_value': PMV}, preds_masked),
    ]

    for batch in (batch_a, batch_b):
        for extra, p in configs:
            args = dict(base_args, **extra)
            loss, logs = masked_l2_ndvi_loss(p, batch, aux, args)
            loss = jax.block_until_ready(loss)
            ref = jax.block_until_ready(_reference_loss(p, batch, args))
            assert jnp.allclose(loss, ref, rtol=1e-3, atol=1e-5), (extra, loss, ref)

    print("KERNEL_OK")
</pallas_src>

<mosaic_0001>
module attributes {stable_mosaic.version = 11 : i64} {
  func.func @_masked_l2_ndvi_kernel(%arg0: i32, %arg1: i32, %arg2: i32, %arg3: memref<1x8x1x16x16xf32, #tpu.memory_space<vmem>>, %arg4: memref<1x8x1x16x16xf32, #tpu.memory_space<vmem>>, %arg5: memref<1x8x1x16x16xf32, #tpu.memory_space<vmem>>, %arg6: memref<1x1x16x16xf32, #tpu.memory_space<vmem>>, %arg7: memref<1x1x2x128xf32, #tpu.memory_space<vmem>>, %arg8: memref<16x16xf32, #tpu.memory_space<vmem>>, %arg9: memref<16x16xf32, #tpu.memory_space<vmem>>) attributes {dimension_semantics = [#tpu.dimension_semantics<parallel>, #tpu.dimension_semantics<parallel>, #tpu.dimension_semantics<arbitrary>], iteration_bounds = array<i64: 2, 1, 1>, scalar_prefetch = 0 : i64, scratch_operands = 2 : i64, tpu.core_type = #tpu.core_type<tc>, window_params = [{transform_indices = @transform_0, window_bounds = array<i64: 1, 8, 1, 16, 16>}, {transform_indices = @transform_1, window_bounds = array<i64: 1, 8, 1, 16, 16>}, {transform_indices = @transform_2, window_bounds = array<i64: 1, 8, 1, 16, 16>}, {transform_indices = @transform_3, window_bounds = array<i64: 1, 1, 16, 16>}, {transform_indices = @transform_4, window_bounds = array<i64: 1, 1, 2, 128>}]} {
    %c0_i32 = arith.constant 0 : i32
    %0 = arith.cmpi eq, %arg2, %c0_i32 : i32
    %1 = arith.extui %0 : i1 to i32
    %c0_i32_0 = arith.constant 0 : i32
    %2 = arith.cmpi ne, %1, %c0_i32_0 : i32
    scf.if %2 {
      %cst_28 = arith.constant 0.000000e+00 : f32
      %28 = vector.broadcast %cst_28 : f32 to vector<16x16xf32>
      %c0_29 = arith.constant 0 : index
      %c0_30 = arith.constant 0 : index
      %29 = vector.load %arg8[%c0_29, %c0_30] : memref<16x16xf32, #tpu.memory_space<vmem>>, vector<16x16xf32>
      tpu.vector_store %arg8[%c0_29, %c0_30], %28 {strides = array<i32>} : memref<16x16xf32, #tpu.memory_space<vmem>>, vector<16x16xf32>,
      %c0_31 = arith.constant 0 : index
      %c0_32 = arith.constant 0 : index
      %30 = vector.load %arg9[%c0_31, %c0_32] : memref<16x16xf32, #tpu.memory_space<vmem>>, vector<16x16xf32>
      tpu.vector_store %arg9[%c0_31, %c0_32], %28 {strides = array<i32>} : memref<16x16xf32, #tpu.memory_space<vmem>>, vector<16x16xf32>,
    } else {
    }
    %c0 = arith.constant 0 : index
    %c0_1 = arith.constant 0 : index
    %c0_2 = arith.constant 0 : index
    %c0_3 = arith.constant 0 : index
    %c0_4 = arith.constant 0 : index
    %3 = vector.load %arg3[%c0, %c0_1, %c0_2, %c0_3, %c0_4] : memref<1x8x1x16x16xf32, #tpu.memory_space<vmem>>, vector<1x8x1x16x16xf32>
    %4 = vector.shape_cast %3 : vector<1x8x1x16x16xf32> to vector<8x16x16xf32>
    %c0_5 = arith.constant 0 : index
    %c0_6 = arith.constant 0 : index
    %c0_7 = arith.constant 0 : index
    %c0_8 = arith.constant 0 : index
    %c0_9 = arith.constant 0 : index
    %5 = vector.load %arg4[%c0_5, %c0_6, %c0_7, %c0_8, %c0_9] : memref<1x8x1x16x16xf32, #tpu.memory_space<vmem>>, vector<1x8x1x16x16xf32>
    %6 = vector.shape_cast %5 : vector<1x8x1x16x16xf32> to vector<8x16x16xf32>
    %c0_10 = arith.constant 0 : index
    %c0_11 = arith.constant 0 : index
    %c0_12 = arith.constant 0 : index
    %c0_13 = arith.constant 0 : index
    %c0_14 = arith.constant 0 : index
    %7 = vector.load %arg5[%c0_10, %c0_11, %c0_12, %c0_13, %c0_14] : memref<1x8x1x16x16xf32, #tpu.memory_space<vmem>>, vector<1x8x1x16x16xf32>
    %8 = vector.shape_cast %7 : vector<1x8x1x16x16xf32> to vector<8x16x16xf32>
    %cst = arith.constant 1.000000e+00 : f32
    %9 = vector.broadcast %cst : f32 to vector<8x16x16xf32>
    %10 = arith.cmpf olt, %8, %9 : vector<8x16x16xf32>
    %11 = arith.subf %4, %6 : vector<8x16x16xf32>
    %cst_15 = arith.constant 0.000000e+00 : f32
    %12 = vector.broadcast %cst_15 : f32 to vector<8x16x16xf32>
    %13 = arith.select %10, %11, %12 : vector<8x16x16xi1>, vector<8x16x16xf32>
    %c0_16 = arith.constant 0 : index
    %c0_17 = arith.constant 0 : index
    %14 = vector.load %arg8[%c0_16, %c0_17] : memref<16x16xf32, #tpu.memory_space<vmem>>, vector<16x16xf32>
    %15 = arith.mulf %13, %13 : vector<8x16x16xf32>
    %cst_18 = arith.constant dense<0.000000e+00> : vector<16x16xf32>
    %16 = vector.multi_reduction <add>, %15, %cst_18 [0] : vector<8x16x16xf32> to vector<16x16xf32>
    %17 = arith.addf %14, %16 : vector<16x16xf32>
    %c0_19 = arith.constant 0 : index
    %c0_20 = arith.constant 0 : index
    %18 = vector.load %arg8[%c0_19, %c0_20] : memref<16x16xf32, #tpu.memory_space<vmem>>, vector<16x16xf32>
    tpu.vector_store %arg8[%c0_19, %c0_20], %17 {strides = array<i32>} : memref<16x16xf32, #tpu.memory_space<vmem>>, vector<16x16xf32>,
    %c0_21 = arith.constant 0 : index
    %c0_22 = arith.constant 0 : index
    %19 = vector.load %arg9[%c0_21, %c0_22] : memref<16x16xf32, #tpu.memory_space<vmem>>, vector<16x16xf32>
    %20 = arith.extui %10 : vector<8x16x16xi1> to vector<8x16x16xi32>
    %21 = arith.sitofp %20 : vector<8x16x16xi32> to vector<8x16x16xf32>
    %cst_23 = arith.constant dense<0.000000e+00> : vector<16x16xf32>
    %22 = vector.multi_reduction <add>, %21, %cst_23 [0] : vector<8x16x16xf32> to vector<16x16xf32>
    %23 = arith.addf %19, %22 : vector<16x16xf32>
    %c0_24 = arith.constant 0 : index
    %c0_25 = arith.constant 0 : index
    %24 = vector.load %arg9[%c0_24, %c0_25] : memref<16x16xf32, #tpu.memory_space<vmem>>, vector<16x16xf32>
    tpu.vector_store %arg9[%c0_24, %c0_25], %23 {strides = array<i32>} : memref<16x16xf32, #tpu.memory_space<vmem>>, vector<16x16xf32>,
    %c0_i32_26 = arith.constant 0 : i32
    %25 = arith.cmpi eq, %arg2, %c0_i32_26 : i32
    %26 = arith.extui %25 : i1 to i32
    %c0_i32_27 = arith.constant 0 : i32
    %27 = arith.cmpi ne, %26, %c0_i32_27 : i32
    scf.if %27 {
      %c0_28 = arith.constant 0 : index
      %c0_29 = arith.constant 0 : index
      %28 = vector.load %arg8[%c0_28, %c0_29] : memref<16x16xf32, #tpu.memory_space<vmem>>, vector<16x16xf32>
      %c0_30 = arith.constant 0 : index
      %c0_31 = arith.constant 0 : index
      %29 = vector.load %arg9[%c0_30, %c0_31] : memref<16x16xf32, #tpu.memory_space<vmem>>, vector<16x16xf32>
      %cst_32 = arith.constant 9.99999993E-9 : f32
      %30 = vector.broadcast %cst_32 : f32 to vector<16x16xf32>
      %31 = arith.addf %29, %30 : vector<16x16xf32>
      %32 = arith.divf %28, %31 : vector<16x16xf32>
      %c0_33 = arith.constant 0 : index
      %c0_34 = arith.constant 0 : index
      %c0_35 = arith.constant 0 : index
      %c0_36 = arith.constant 0 : index
      %33 = vector.load %arg6[%c0_33, %c0_34, %c0_35, %c0_36] : memref<1x1x16x16xf32, #tpu.memory_space<vmem>>, vector<1x1x16x16xf32>
      %34 = vector.shape_cast %33 : vector<1x1x16x16xf32> to vector<16x16xf32>
      %cst_37 = arith.constant 2.000000e+01 : f32
      %35 = vector.broadcast %cst_37 : f32 to vector<16x16xf32>
      %36 = arith.cmpf oge, %34, %35 : vector<16x16xf32>
      %cst_38 = arith.constant 8.000000e+01 : f32
      %37 = vector.broadcast %cst_38 : f32 to vector<16x16xf32>
      %38 = arith.cmpf ole, %34, %37 : vector<16x16xf32>
      %39 = arith.andi %36, %38 : vector<16x16xi1>
      %40 = arith.extui %39 : vector<16x16xi1> to vector<16x16xi32>
      %41 = arith.sitofp %40 : vector<16x16xi32> to vector<16x16xf32>
      %42 = arith.mulf %32, %41 : vector<16x16xf32>
      %43 = vector.shape_cast %42 : vector<16x16xf32> to vector<1x16x16xf32>
      %cst_39 = arith.constant dense<0.000000e+00> : vector<1xf32>
      %44 = vector.multi_reduction <add>, %43, %cst_39 [1, 2] : vector<1x16x16xf32> to vector<1xf32>
      %45 = vector.shape_cast %44 : vector<1xf32> to vector<1x1x1xf32>
      %46 = vector.extract %45[0, 0, 0] : f32 from vector<1x1x1xf32>
      %47 = vector.shape_cast %41 : vector<16x16xf32> to vector<1x16x16xf32>
      %cst_40 = arith.constant dense<0.000000e+00> : vector<1xf32>
      %48 = vector.multi_reduction <add>, %47, %cst_40 [1, 2] : vector<1x16x16xf32> to vector<1xf32>
      %49 = vector.shape_cast %48 : vector<1xf32> to vector<1x1x1xf32>
      %50 = vector.extract %49[0, 0, 0] : f32 from vector<1x1x1xf32>
      %51 = vector.broadcast %46 : f32 to vector<1x128xf32>
      %c0_41 = arith.constant 0 : index
      %c0_42 = arith.constant 0 : index
      %c0_43 = arith.constant 0 : index
      %c0_44 = arith.constant 0 : index
      %52 = vector.load %arg7[%c0_41, %c0_42, %c0_43, %c0_44] : memref<1x1x2x128xf32, #tpu.memory_space<vmem>>, vector<1x1x1x128xf32>
      %53 = vector.shape_cast %52 : vector<1x1x1x128xf32> to vector<1x128xf32>
      %54 = vector.shape_cast %51 : vector<1x128xf32> to vector<1x1x1x128xf32>
      tpu.vector_store %arg7[%c0_41, %c0_42, %c0_43, %c0_44], %54 {strides = array<i32>} : memref<1x1x2x128xf32, #tpu.memory_space<vmem>>, vector<1x1x1x128xf32>,
      %55 = vector.broadcast %50 : f32 to vector<1x128xf32>
      %c0_45 = arith.constant 0 : index
      %c0_46 = arith.constant 0 : index
      %c1 = arith.constant 1 : index
      %c0_47 = arith.constant 0 : index
      %56 = vector.load %arg7[%c0_45, %c0_46, %c1, %c0_47] : memref<1x1x2x128xf32, #tpu.memory_space<vmem>>, vector<1x1x1x128xf32>
      %57 = vector.shape_cast %56 : vector<1x1x1x128xf32> to vector<1x128xf32>
      %58 = vector.shape_cast %55 : vector<1x128xf32> to vector<1x1x1x128xf32>
      tpu.vector_store %arg7[%c0_45, %c0_46, %c1, %c0_47], %58 {strides = array<i32>} : memref<1x1x2x128xf32, #tpu.memory_space<vmem>>, vector<1x1x1x128xf32>,
    } else {
    }
    return
  }
  func.func @transform_0(%arg0: i32, %arg1: i32, %arg2: i32) -> (i32, i32, i32, i32, i32) {
    %c1_i32 = arith.constant 1 : i32
    %0 = arith.addi %c1_i32, %arg2 : i32
    %c1_i32_0 = arith.constant 1 : i32
    %c0_i32 = arith.constant 0 : i32
    %c0_i32_1 = arith.constant 0 : i32
    return %arg0, %0, %c1_i32_0, %arg1, %c0_i32 : i32, i32, i32, i32, i32
  }
  func.func @transform_1(%arg0: i32, %arg1: i32, %arg2: i32) -> (i32, i32, i32, i32, i32) {
    %c0_i32 = arith.constant 0 : i32
    %0 = arith.addi %c0_i32, %arg2 : i32
    %c0_i32_0 = arith.constant 0 : i32
    %c0_i32_1 = arith.constant 0 : i32
    %c0_i32_2 = arith.constant 0 : i32
    return %arg0, %0, %c0_i32_0, %arg1, %c0_i32_1 : i32, i32, i32, i32, i32
  }
  func.func @transform_2(%arg0: i32, %arg1: i32, %arg2: i32) -> (i32, i32, i32, i32, i32) {
    %c1_i32 = arith.constant 1 : i32
    %0 = arith.addi %c1_i32, %arg2 : i32
    %c0_i32 = arith.constant 0 : i32
    %c0_i32_0 = arith.constant 0 : i32
    %c0_i32_1 = arith.constant 0 : i32
    return %arg0, %0, %c0_i32, %arg1, %c0_i32_0 : i32, i32, i32, i32, i32
  }
  func.func @transform_3(%arg0: i32, %arg1: i32, %arg2: i32) -> (i32, i32, i32, i32) {
    %c0_i32 = arith.constant 0 : i32
    %c0_i32_0 = arith.constant 0 : i32
    %c0_i32_1 = arith.constant 0 : i32
    return %arg0, %c0_i32, %arg1, %c0_i32_0 : i32, i32, i32, i32
  }
  func.func @transform_4(%arg0: i32, %arg1: i32, %arg2: i32) -> (i32, i32, i32, i32) {
    %c0_i32 = arith.constant 0 : i32
    %c0_i32_0 = arith.constant 0 : i32
    %c0_i32_1 = arith.constant 0 : i32
    return %arg0, %arg1, %c0_i32, %c0_i32_0 : i32, i32, i32, i32
  }
}

</mosaic_0001>

<llo_original>
// kernel: tpu_custom_call.1
$region0: #{tpu_custom_call.1}
  #allocation0 [shape = 'u32[]', space=smem, size = 0x4, offset = 0x4, fixed_abs, tag = 'smem constant byte address 0x4 - core index']
  #allocation1 [shape = 'u32[72,128]{1,0:T(1,128)}', space=vmem, size = 0x9000, scoped, tag = 'internal scratch']
  #allocation2 [shape = 'f32[16,16]{1,0:T(8,128)}', space=vmem, size = 0x2000, scoped, tag = 'scratch operand']
  #allocation3 [shape = 'f32[16,16]{1,0:T(8,128)}', space=vmem, size = 0x2000, scoped, tag = 'scratch operand']
  #allocation13 [shape = 's32[]', space=sflag, size = 0x4, offset = 0, fixed_abs, tag = 'sflag constant byte address 0x0 - dummy sync flag']
  #allocation15 [shape = 's32[]', space=sflag, size = 0x4, offset = 0, fixed_abs, tag = 'sflag constant byte address 0x0 - dummy sync flag']
  %s0 = inlined_call_operand.hbm [shape: f32[2,16,3,16,16], index: 0, kind: input, shape index: {}]
  %s1 = inlined_call_operand.hbm [shape: f32[2,8,2,16,16], index: 1, kind: input, shape index: {}]
  %s2 = inlined_call_operand.hbm [shape: f32[2,16,1,16,16], index: 2, kind: input, shape index: {}]
  %s3 = inlined_call_operand.hbm [shape: f32[2,1,16,16], index: 3, kind: input, shape index: {}]
  %s4 = inlined_call_operand.hbm [shape: f32[2,1,2,128], index: 4, kind: output, shape index: {}]
  %s5 = sld [smem:[#allocation0]]
  $region73: #{tpu_custom_call.1} parent=0
    _
  %s7 = ssub.s32 1, %s5
  %s8 = scalar_select 0, %s7, %s5
  $region1: #{tpu_custom_call.1} parent=0
    #allocation4 [shape = 'u8[131072]{0}', space=vmem, size = 0x20000, scoped, tag = 'input window, operand 0']
    #allocation5 [shape = 's32[2]{0}', space=sflag, size = 0x8, scoped, tag = 'scoped memory for tpu_custom_call.1']
    #allocation6 [shape = 's32[2]{0}', space=sflag, size = 0x8, scoped, tag = 'scoped memory for tpu_custom_call.1']
    #allocation7 [shape = 'u8[131072]{0}', space=vmem, size = 0x20000, scoped, tag = 'input window, operand 1']
    #allocation8 [shape = 's32[2]{0}', space=sflag, size = 0x8, scoped, tag = 'scoped memory for tpu_custom_call.1']
    #allocation9 [shape = 'u8[131072]{0}', space=vmem, size = 0x20000, scoped, tag = 'input window, operand 2']
    #allocation10 [shape = 'u8[16384]{0}', space=vmem, size = 0x4000, scoped, tag = 'input window, operand 3']
    #allocation11 [shape = 's32[2]{0}', space=sflag, size = 0x8, scoped, tag = 'scoped memory for tpu_custom_call.1']
    #allocation12 [shape = 'u8[2048]{0}', space=vmem, size = 0x800, scoped, tag = 'output window, operand 0']
    %9 = vsyncpa [#allocation5], 0
    %s10 = scalar_lea.sflag [#allocation5], 1
    %11 = vsyncpa %s10, 0
    %12 = vsyncpa [#allocation8], 0
    %s13 = scalar_lea.sflag [#allocation8], 1
    %14 = vsyncpa %s13, 0
    %15 = vsyncpa [#allocation11], 0
    %s16 = scalar_lea.sflag [#allocation11], 1
    %17 = vsyncpa %s16, 0
    %18 = vsyncpa [#allocation6], 0
    %s19 = scalar_lea.sflag [#allocation6], 1
    %20 = vsyncpa %s19, 0
    loop: start=0, step=1, limit=4
    $region2: #{tpu_custom_call.1} parent=1 // loop_pre_header
      _
    $region3: #{tpu_custom_call.1} parent=1 // loop_header
      %s22 = sphi 0, %s26
      %p23 = scmp.ge.s32.totalorder %s22, 4
      %s29 = sphi 0, %s48
      %s30 = sphi 0, %s44
      %s31 = sphi 0, %s40
      %s32 = sphi 0, %s29
      %s33 = sphi 0, %s30
      %s34 = sphi 0, %s31
      %s35 = sphi 0, %s32
      %s36 = sphi 0, %s33
      %s37 = sphi 0, %s34
      %s57 = sphi 0, %s59
      %s60 = sphi 0, %s57
      %s61 = sphi 0, %s60
      %s77 = sphi 0, %s61
      %s87 = sphi 0, %s89
      %s90 = sphi 0, %s87
      %s91 = sphi 0, %s90
      %s107 = sphi 0, %s91
      %s119 = sphi 0, %s121
      %s122 = sphi 0, %s119
      %s123 = sphi 0, %s122
      %s139 = sphi 0, %s123
      %s147 = sphi 0, %s149
      %s150 = sphi 0, %s147
      %s151 = sphi 0, %s150
      %s167 = sphi 0, %s151
      %s175 = sphi 0, %s177
      %s178 = sphi 0, %s175
      %s179 = sphi 0, %s178
      %s195 = sphi 0, %s179
    $region4: #{tpu_custom_call.1} parent=1 // loop_header_branch
      %25 = sbr.rel (%p23) target = $region8
    $region5: #{tpu_custom_call.1} parent=1 // loop_body
      %s27 = ssub.s32 %s22, 1
      %s28 = ssub.s32 %s22, 2
      %s38 = sadd.s32 1, %s31
      %p39 = scmp.ge.s32.totalorder %s38, 1
      %s40 = scalar_select %p39, 0, %s38
      %s41 = sadd.s32 1, %s30
      %s42 = scalar_select %p39, %s41, %s30
      %p43 = scmp.ge.s32.totalorder %s42, 1
      %s44 = scalar_select %p43, 0, %s42
      %s45 = sadd.s32 1, %s29
      %s46 = scalar_select %p43, %s45, %s29
      %p47 = scmp.ge.s32.totalorder %s46, 2
      %s48 = scalar_select %p47, 0, %s46
      %s49 = sadd.s32 %s31, 1
      %s50 = sadd.s32 %s40, 1
      %s51 = ssub.s32 %s29, %s48
      %s52 = ssub.s32 %s49, %s50
      %s53 = sor.u32 %s51, %s52
      %s54 = ssub.s32 %s30, %s44
      %s55 = sor.u32 %s53, %s54
      %p56 = scmp.eq.s32.totalorder %s55, 0
      %s58 = sadd.s32 %s57, 1
      %s59 = scalar_select %p56, %s57, %s58
      %p62 = pneg %p56
      %p63 = scmp.eq.s32.totalorder %s22, 1
      %p64 = por %p62, %p63
      %p65 = scmp.ne.s32.totalorder %s57, %s60
      %p66 = scmp.eq.s32.totalorder %s22, 0
      %p67 = por %p65, %p66
      %p68 = scmp.ne.s32.totalorder %s57, %s60
      %p69 = scmp.eq.s32.totalorder %s27, 1
      %p70 = por %p68, %p69
      %p71 = scmp.ne.s32.totalorder %s60, %s61
      %p72 = scmp.eq.s32.totalorder %s27, 0
      %p73 = por %p71, %p72
      %p74 = scmp.ne.s32.totalorder %s60, %s61
      %p75 = scmp.eq.s32.totalorder %s28, 1
      %p76 = por %p74, %p75
      %p78 = scmp.ne.s32.totalorder %s61, %s77
      %p79 = scmp.eq.s32.totalorder %s28, 0
      %p80 = por %p78, %p79
      %s81 = ssub.s32 %s29, %s48
      %s82 = ssub.s32 %s31, %s40
      %s83 = sor.u32 %s81, %s82
      %s84 = ssub.s32 %s30, %s44
      %s85 = sor.u32 %s83, %s84
      %p86 = scmp.eq.s32.totalorder %s85, 0
      %s88 = sadd.s32 %s87, 1
      %s89 = scalar_select %p86, %s87, %s88
      %p92 = pneg %p86
      %p93 = scmp.eq.s32.totalorder %s22, 1
      %p94 = por %p92, %p93
      %p95 = scmp.ne.s32.totalorder %s87, %s90
      %p96 = scmp.eq.s32.totalorder %s22, 0
      %p97 = por %p95, %p96
      %p98 = scmp.ne.s32.totalorder %s87, %s90
      %p99 = scmp.eq.s32.totalorder %s27, 1
      %p100 = por %p98, %p99
      %p101 = scmp.ne.s32.totalorder %s90, %s91
      %p102 = scmp.eq.s32.totalorder %s27, 0
      %p103 = por %p101, %p102
      %p104 = scmp.ne.s32.totalorder %s90, %s91
      %p105 = scmp.eq.s32.totalorder %s28, 1
      %p106 = por %p104, %p105
      %p108 = scmp.ne.s32.totalorder %s91, %s107
      %p109 = scmp.eq.s32.totalorder %s28, 0
      %p110 = por %p108, %p109
      %s111 = sadd.s32 %s31, 1
      %s112 = sadd.s32 %s40, 1
      %s113 = ssub.s32 %s29, %s48
      %s114 = ssub.s32 %s111, %s112
      %s115 = sor.u32 %s113, %s114
      %s116 = ssub.s32 %s30, %s44
      %s117 = sor.u32 %s115, %s116
      %p118 = scmp.eq.s32.totalorder %s117, 0
      %s120 = sadd.s32 %s119, 1
      %s121 = scalar_select %p118, %s119, %s120
      %p124 = pneg %p118
      %p125 = scmp.eq.s32.totalorder %s22, 1
      %p126 = por %p124, %p125
      %p127 = scmp.ne.s32.totalorder %s119, %s122
      %p128 = scmp.eq.s32.totalorder %s22, 0
      %p129 = por %p127, %p128
      %p130 = scmp.ne.s32.totalorder %s119, %s122
      %p131 = scmp.eq.s32.totalorder %s27, 1
      %p132 = por %p130, %p131
      %p133 = scmp.ne.s32.totalorder %s122, %s123
      %p134 = scmp.eq.s32.totalorder %s27, 0
      %p135 = por %p133, %p134
      %p136 = scmp.ne.s32.totalorder %s122, %s123
      %p137 = scmp.eq.s32.totalorder %s28, 1
      %p138 = por %p136, %p137
      %p140 = scmp.ne.s32.totalorder %s123, %s139
      %p141 = scmp.eq.s32.totalorder %s28, 0
      %p142 = por %p140, %p141
      %s143 = ssub.s32 %s29, %s48
      %s144 = ssub.s32 %s30, %s44
      %s145 = sor.u32 %s143, %s144
      %p146 = scmp.eq.s32.totalorder %s145, 0
      %s148 = sadd.s32 %s147, 1
      %s149 = scalar_select %p146, %s147, %s148
      %p152 = pneg %p146
      %p153 = scmp.eq.s32.totalorder %s22, 1
      %p154 = por %p152, %p153
      %p155 = scmp.ne.s32.totalorder %s147, %s150
      %p156 = scmp.eq.s32.totalorder %s22, 0
      %p157 = por %p155, %p156
      %p158 = scmp.ne.s32.totalorder %s147, %s150
      %p159 = scmp.eq.s32.totalorder %s27, 1
      %p160 = por %p158, %p159
      %p161 = scmp.ne.s32.totalorder %s150, %s151
      %p162 = scmp.eq.s32.totalorder %s27, 0
      %p163 = por %p161, %p162
      %p164 = scmp.ne.s32.totalorder %s150, %s151
      %p165 = scmp.eq.s32.totalorder %s28, 1
      %p166 = por %p164, %p165
      %p168 = scmp.ne.s32.totalorder %s151, %s167
      %p169 = scmp.eq.s32.totalorder %s28, 0
      %p170 = por %p168, %p169
      %s171 = ssub.s32 %s29, %s48
      %s172 = ssub.s32 %s30, %s44
      %s173 = sor.u32 %s171, %s172
      %p174 = scmp.eq.s32.totalorder %s173, 0
      %s176 = sadd.s32 %s175, 1
      %s177 = scalar_select %p174, %s175, %s176
      %p180 = pneg %p174
      %p181 = scmp.eq.s32.totalorder %s22, 1
      %p182 = por %p180, %p181
      %p183 = scmp.ne.s32.totalorder %s175, %s178
      %p184 = scmp.eq.s32.totalorder %s22, 0
      %p185 = por %p183, %p184
      %p186 = scmp.ne.s32.totalorder %s175, %s178
      %p187 = scmp.eq.s32.totalorder %s27, 1
      %p188 = por %p186, %p187
      %p189 = scmp.ne.s32.totalorder %s178, %s179
      %p190 = scmp.eq.s32.totalorder %s27, 0
      %p191 = por %p189, %p190
      %p192 = scmp.ne.s32.totalorder %s178, %s179
      %p193 = scmp.eq.s32.totalorder %s28, 1
      %p194 = por %p192, %p193
      %p196 = scmp.ne.s32.totalorder %s179, %s195
      %p197 = scmp.eq.s32.totalorder %s28, 0
      %p198 = por %p196, %p197
      %p199 = scmp.le.s32.totalorder 1, %s22
      %p200 = scmp.lt.s32.totalorder %s22, 3
      %p201 = pnand %p199, %p200
      %p202 = pneg %p201
      // Predicated region
      $region9: #{tpu_custom_call.1} parent=5 // pred_check
        _
      $region10: #{tpu_custom_call.1} parent=5 // pred_check_branch
        %204 = sbr.rel (%p201) target = $region12
      $region11: #{tpu_custom_call.1} parent=5 // pred_region
        %s205 = ssub.s32 %s22, 1
      $region12: #{tpu_custom_call.1} parent=5 // pred_fallthru
        _
      %p206 = scmp.lt.s32.totalorder %s22, 2
      // Predicated region
      $region13: #{tpu_custom_call.1} parent=5 // pred_check
        %p207 = pneg %p206
      $region14: #{tpu_custom_call.1} parent=5 // pred_check_branch
        %209 = sbr.rel (%p207) target = $region16
      $region15: #{tpu_custom_call.1} parent=5 // pred_region
        // Predicated region
        $region17: #{tpu_custom_call.1} parent=15 // pred_check
          %p210 = pneg %p67
        $region18: #{tpu_custom_call.1} parent=15 // pred_check_branch
          %212 = sbr.rel (%p210) target = $region20
        $region19: #{tpu_custom_call.1} parent=15 // pred_region
          #allocation14 [shape = 'u32[6]{0}', space=smem, size = 0x18, scoped, tag = 'DMA stride descriptor']
          %s213 = sand.u32 %s57, 1
          %s214 = scalar_lea.sflag [#allocation5], %s213
          %s215 = sand.u32 %s57, 1
          %s216 = smul.addr %s215, 128
          %s217 = scalar_lea.vmem [#allocation4], %s216
          %s218 = sadd.s32 %s31, 1
          %s219 = smul.u32 8, %s218
          %s220 = smul.u32 2, %s30
          %222 = vsyncadd %s214, 0
          %s223 = sadd.s32 %s220, 2
          %s224 = smul.addr %s219, 6
          %s225 = sadd.s32 %s223, %s224
          %s226 = smul.addr %s29, 96
          %s227 = sadd.s32 %s225, %s226
          %s228 = smul.addr %s227, 8
          %s229 = scalar_lea.hbm %s0, %s228
          %s231 = sshll.u32 1, 14
          %s232 = sxor.u32 4294967295, %s231
          %s234 = sld [smem:[#allocation0]]
          %s235 = sadd.s32 2, %s234
          %s237 = sshll.u32 7, 26
          %s238 = sxor.u32 4294967295, %s237
          %s239 = sand.u32 0, %s238
          %s240 = sshll.u32 %s235, 26
          %s241 = sor.u32 %s239, %s240
          %s242 = sshll.u32 %s229, 4
          %s243 = int_to_ptr.hbm [resolvable:$true] %s242
          %s244 = sshll.u32 %s217, 4
          %s245 = int_to_ptr.vmem [resolvable:$true] %s244
          %251 = sst [smem:[#allocation14]] 768
          %s252 = scalar_lea.smem [#allocation14], 1
          %253 = sst [smem:[%s252]] 256
          %s254 = scalar_lea.smem [#allocation14], 2
          %255 = sst [smem:[%s254]] 2
          %s256 = scalar_lea.smem [#allocation14], 3
          %257 = sst [smem:[%s256]] 128
          %s258 = scalar_lea.smem [#allocation14], 4
          %259 = sst [smem:[%s258]] 128
          %s260 = scalar_lea.smem [#allocation14], 5
          %261 = sst [smem:[%s260]] 8
          %263 = dma.general %s243, 2048, %s245, %s214, [#allocation13], [#allocation14], %s241, 0
        $region20: #{tpu_custom_call.1} parent=15 // pred_fallthru
          _
        // Predicated region
        $region21: #{tpu_custom_call.1} parent=15 // pred_check
          %p264 = pneg %p97
        $region22: #{tpu_custom_call.1} parent=15 // pred_check_branch
          %266 = sbr.rel (%p264) target = $region24
        $region23: #{tpu_custom_call.1} parent=15 // pred_region
          #allocation16 [shape = 'u32[6]{0}', space=smem, size = 0x18, scoped, tag = 'DMA stride descriptor']
          %s267 = sand.u32 %s22, 1
          %s268 = scalar_lea.sflag [#allocation8], %s267
          %s269 = sand.u32 %s87, 1
          %s270 = smul.addr %s269, 128
          %s271 = scalar_lea.vmem [#allocation7], %s270
          %s272 = smul.u32 8, %s31
          %s273 = smul.u32 2, %s30
          %275 = vsyncadd %s268, 0
          %s276 = smul.addr %s272, 4
          %s277 = sadd.s32 %s273, %s276
          %s278 = smul.addr %s29, 32
          %s279 = sadd.s32 %s277, %s278
          %s280 = smul.addr %s279, 8
          %s281 = scalar_lea.hbm %s1, %s280
          %s283 = sshll.u32 1, 14
          %s284 = sxor.u32 4294967295, %s283
          %s286 = sld [smem:[#allocation0]]
          %s287 = sadd.s32 2, %s286
          %s289 = sshll.u32 7, 26
          %s290 = sxor.u32 4294967295, %s289
          %s291 = sand.u32 0, %s290
          %s292 = sshll.u32 %s287, 26
          %s293 = sor.u32 %s291, %s292
          %s294 = sshll.u32 %s281, 4
          %s295 = int_to_ptr.hbm [resolvable:$true] %s294
          %s296 = sshll.u32 %s271, 4
          %s297 = int_to_ptr.vmem [resolvable:$true] %s296
          %303 = sst [smem:[#allocation16]] 512
          %s304 = scalar_lea.smem [#allocation16], 1
          %305 = sst [smem:[%s304]] 256
          %s306 = scalar_lea.smem [#allocation16], 2
          %307 = sst [smem:[%s306]] 2
          %s308 = scalar_lea.smem [#allocation16], 3
          %309 = sst [smem:[%s308]] 128
          %s310 = scalar_lea.smem [#allocation16], 4
          %311 = sst [smem:[%s310]] 128
          %s312 = scalar_lea.smem [#allocation16], 5
          %313 = sst [smem:[%s312]] 8
          %315 = dma.general %s295, 2048, %s297, %s268, [#allocation15], [#allocation16], %s293, 0
        $region24: #{tpu_custom_call.1} parent=15 // pred_fallthru
          _
        // Predicated region
        $region25: #{tpu_custom_call.1} parent=15 // pred_check
          %p316 = pneg %p129
        $region26: #{tpu_custom_call.1} parent=15 // pred_check_branch
          %318 = sbr.rel (%p316) target = $region28
        $region27: #{tpu_custom_call.1} parent=15 // pred_region
          %s319 = sand.u32 %s22, 1
          %s320 = scalar_lea.sflag [#allocation8], %s319
          %s321 = sand.u32 %s119, 1
          %s322 = smul.addr %s321, 128
          %s323 = scalar_lea.vmem [#allocation9], %s322
          %s324 = sadd.s32 %s31, 1
          %s325 = smul.u32 8, %s324
          %s326 = smul.u32 2, %s30
          %328 = vsyncadd %s320, 0
          %s329 = smul.addr %s325, 2
          %s330 = sadd.s32 %s326, %s329
          %s331 = smul.addr %s29, 32
          %s332 = sadd.s32 %s330, %s331
          %s333 = smul.addr %s332, 8
          %s334 = scalar_lea.hbm %s2, %s333
          %s335 = sshll.u32 %s334, 4
          %s336 = int_to_ptr.hbm [resolvable:$true] %s335
          %s337 = sshll.u32 %s323, 4
          %s338 = int_to_ptr.vmem [resolvable:$true] %s337
          %343 = dma.hbm_to_vmem [thread:$0]  %s336, 2048, %s338, %s320, 128, 128, 8
        $region28: #{tpu_custom_call.1} parent=15 // pred_fallthru
          _
        // Predicated region
        $region29: #{tpu_custom_call.1} parent=15 // pred_check
          %p344 = pneg %p157
        $region30: #{tpu_custom_call.1} parent=15 // pred_check_branch
          %346 = sbr.rel (%p344) target = $region32
        $region31: #{tpu_custom_call.1} parent=15 // pred_region
          %s347 = sand.u32 %s147, 1
          %s348 = scalar_lea.sflag [#allocation11], %s347
          %s349 = sand.u32 %s147, 1
          %s350 = smul.addr %s349, 16
          %s351 = scalar_lea.vmem [#allocation10], %s350
          %s352 = smul.u32 2, %s30
          %354 = vsyncadd %s348, 0
          %s355 = smul.addr %s29, 2
          %s356 = sadd.s32 %s352, %s355
          %s357 = smul.addr %s356, 8
          %s358 = scalar_lea.hbm %s3, %s357
          %s359 = sshll.u32 %s358, 4
          %s360 = int_to_ptr.hbm [resolvable:$true] %s359
          %s361 = sshll.u32 %s351, 4
          %s362 = int_to_ptr.vmem [resolvable:$true] %s361
          %367 = dma.hbm_to_vmem [thread:$0]  %s360, 256, %s362, %s348, 128, 128, 8
        $region32: #{tpu_custom_call.1} parent=15 // pred_fallthru
          _
      $region16: #{tpu_custom_call.1} parent=5 // pred_fallthru
        _
      %p368 = scmp.le.s32.totalorder 1, %s22
      %p369 = scmp.lt.s32.totalorder %s22, 3
      %p370 = pnand %p368, %p369
      %p371 = pneg %p370
      // Predicated region
      $region33: #{tpu_custom_call.1} parent=5 // pred_check
        _
      $region34: #{tpu_custom_call.1} parent=5 // pred_check_branch
        %373 = sbr.rel (%p370) target = $region36
      $region35: #{tpu_custom_call.1} parent=5 // pred_region
        %s374 = ssub.s32 %s22, 1
        %s375 = sand.u32 %s60, 1
        %s376 = scalar_lea.sflag [#allocation5], %s375
        %s377 = sand.u32 %s60, 1
        %s378 = smul.addr %s377, 128
        %s379 = scalar_lea.vmem [#allocation4], %s378
        // Predicated region
        $region37: #{tpu_custom_call.1} parent=35 // pred_check
          %p380 = pneg %p73
        $region38: #{tpu_custom_call.1} parent=35 // pred_check_branch
          %382 = sbr.rel (%p380) target = $region40
        $region39: #{tpu_custom_call.1} parent=35 // pred_region
          %384 = dma.done %s376, 2048
        $region40: #{tpu_custom_call.1} parent=35 // pred_fallthru
          _
        %s385 = sand.u32 %s27, 1
        %s386 = scalar_lea.sflag [#allocation8], %s385
        %s387 = sand.u32 %s90, 1
        %s388 = smul.addr %s387, 128
        %s389 = scalar_lea.vmem [#allocation7], %s388
        // Predicated region
        $region41: #{tpu_custom_call.1} parent=35 // pred_check
          %p390 = pneg %p103
        $region42: #{tpu_custom_call.1} parent=35 // pred_check_branch
          %392 = sbr.rel (%p390) target = $region44
        $region43: #{tpu_custom_call.1} parent=35 // pred_region
          %394 = dma.done %s386, 2048
        $region44: #{tpu_custom_call.1} parent=35 // pred_fallthru
          _
        %s395 = sand.u32 %s27, 1
        %s396 = scalar_lea.sflag [#allocation8], %s395
        %s397 = sand.u32 %s122, 1
        %s398 = smul.addr %s397, 128
        %s399 = scalar_lea.vmem [#allocation9], %s398
        // Predicated region
        $region45: #{tpu_custom_call.1} parent=35 // pred_check
          %p400 = pneg %p135
        $region46: #{tpu_custom_call.1} parent=35 // pred_check_branch
          %402 = sbr.rel (%p400) target = $region48
        $region47: #{tpu_custom_call.1} parent=35 // pred_region
          %404 = dma.done %s396, 2048
        $region48: #{tpu_custom_call.1} parent=35 // pred_fallthru
          _
        %s405 = sand.u32 %s150, 1
        %s406 = scalar_lea.sflag [#allocation11], %s405
        %s407 = sand.u32 %s150, 1
        %s408 = smul.addr %s407, 16
        %s409 = scalar_lea.vmem [#allocation10], %s408
        // Predicated region
        $region49: #{tpu_custom_call.1} parent=35 // pred_check
          %p410 = pneg %p163
        $region50: #{tpu_custom_call.1} parent=35 // pred_check_branch
          %412 = sbr.rel (%p410) target = $region52
        $region51: #{tpu_custom_call.1} parent=35 // pred_region
          %414 = dma.done %s406, 256
        $region52: #{tpu_custom_call.1} parent=35 // pred_fallthru
          _
        %s415 = sand.u32 %s60, 1
        %s416 = scalar_lea.sflag [#allocation5], %s415
        %s417 = sand.u32 %s60, 1
        %s418 = smul.addr %s417, 128
        %s419 = scalar_lea.vmem [#allocation4], %s418
        %p420 = pneg %p73
        %p421 = pneg %p70
        %s422 = sand.u32 %s27, 1
        %s423 = scalar_lea.sflag [#allocation8], %s422
        %s424 = sand.u32 %s90, 1
        %s425 = smul.addr %s424, 128
        %s426 = scalar_lea.vmem [#allocation7], %s425
        %p427 = pneg %p103
        %p428 = pneg %p100
        %s429 = sand.u32 %s27, 1
        %s430 = scalar_lea.sflag [#allocation8], %s429
        %s431 = sand.u32 %s122, 1
        %s432 = smul.addr %s431, 128
        %s433 = scalar_lea.vmem [#allocation9], %s432
        %p434 = pneg %p135
        %p435 = pneg %p132
        %s436 = sand.u32 %s150, 1
        %s437 = scalar_lea.sflag [#allocation11], %s436
        %s438 = sand.u32 %s150, 1
        %s439 = smul.addr %s438, 16
        %s440 = scalar_lea.vmem [#allocation10], %s439
        %p441 = pneg %p163
        %p442 = pneg %p160
        %p443 = pneg %p191
        %p444 = pneg %p188
        %s445 = sand.u32 %s178, 1
        %s446 = scalar_lea.sflag [#allocation6], %s445
        %s447 = sand.u32 %s178, 1
        %s448 = smul.addr %s447, 2
        %s449 = scalar_lea.vmem [#allocation12], %s448
        %s450 = sadd.s32 %s34, 1
        %s451 = smul.u32 8, %s450
        %s452 = smul.u32 2, %s33
        %s453 = smul.u32 8, %s34
        %s454 = smul.u32 2, %s33
        %s455 = sadd.s32 %s34, 1
        %s456 = smul.u32 8, %s455
        %s457 = smul.u32 2, %s33
        %s458 = smul.u32 2, %s33
        %p459 = scmp.eq.s32.totalorder %s34, 0
        // Predicated region
        $region53: #{tpu_custom_call.1} parent=35 // pred_check
          %p460 = pneg %p459
        $region54: #{tpu_custom_call.1} parent=35 // pred_check_branch
          %462 = sbr.rel (%p460) target = $region56
        $region55: #{tpu_custom_call.1} parent=35 // pred_region
          %vm463 = vcmask 130048
          %464 = vst.msk [vmem:[#allocation2] sm:$0xff] %vm463, 0.0
          %465 = vst.msk [vmem:[#allocation2 + $0x8] sm:$0xff] %vm463, 0.0
          %466 = vst.msk [vmem:[#allocation3] sm:$0xff] %vm463, 0.0
          %467 = vst.msk [vmem:[#allocation3 + $0x8] sm:$0xff] %vm463, 0.0
        $region56: #{tpu_custom_call.1} parent=35 // pred_fallthru
          _
        %v468 = vld [vmem:[%s379] sm:$0xff]
        %v469 = vld [vmem:[%s379 + $0x8] sm:$0xff]
        %v470 = vld [vmem:[%s379 + $0x10] sm:$0xff]
        %v471 = vld [vmem:[%s379 + $0x18] sm:$0xff]
        %v472 = vld [vmem:[%s379 + $0x20] sm:$0xff]
        %v473 = vld [vmem:[%s379 + $0x28] sm:$0xff]
        %v474 = vld [vmem:[%s379 + $0x30] sm:$0xff]
        %v475 = vld [vmem:[%s379 + $0x38] sm:$0xff]
        %v476 = vld [vmem:[%s379 + $0x40] sm:$0xff]
        %v477 = vld [vmem:[%s379 + $0x48] sm:$0xff]
        %v478 = vld [vmem:[%s379 + $0x50] sm:$0xff]
        %v479 = vld [vmem:[%s379 + $0x58] sm:$0xff]
        %v480 = vld [vmem:[%s379 + $0x60] sm:$0xff]
        %v481 = vld [vmem:[%s379 + $0x68] sm:$0xff]
        %v482 = vld [vmem:[%s379 + $0x70] sm:$0xff]
        %v483 = vld [vmem:[%s379 + $0x78] sm:$0xff]
        %v484 = vld [vmem:[%s389] sm:$0xff]
        %v485 = vld [vmem:[%s389 + $0x8] sm:$0xff]
        %v486 = vld [vmem:[%s389 + $0x10] sm:$0xff]
        %v487 = vld [vmem:[%s389 + $0x18] sm:$0xff]
        %v488 = vld [vmem:[%s389 + $0x20] sm:$0xff]
        %v489 = vld [vmem:[%s389 + $0x28] sm:$0xff]
        %v490 = vld [vmem:[%s389 + $0x30] sm:$0xff]
        %v491 = vld [vmem:[%s389 + $0x38] sm:$0xff]
        %v492 = vld [vmem:[%s389 + $0x40] sm:$0xff]
        %v493 = vld [vmem:[%s389 + $0x48] sm:$0xff]
        %v494 = vld [vmem:[%s389 + $0x50] sm:$0xff]
        %v495 = vld [vmem:[%s389 + $0x58] sm:$0xff]
        %v496 = vld [vmem:[%s389 + $0x60] sm:$0xff]
        %v497 = vld [vmem:[%s389 + $0x68] sm:$0xff]
        %v498 = vld [vmem:[%s389 + $0x70] sm:$0xff]
        %v499 = vld [vmem:[%s389 + $0x78] sm:$0xff]
        %v500 = vld [vmem:[%s399] sm:$0xff]
        %v501 = vld [vmem:[%s399 + $0x8] sm:$0xff]
        %v502 = vld [vmem:[%s399 + $0x10] sm:$0xff]
        %v503 = vld [vmem:[%s399 + $0x18] sm:$0xff]
        %v504 = vld [vmem:[%s399 + $0x20] sm:$0xff]
        %v505 = vld [vmem:[%s399 + $0x28] sm:$0xff]
        %v506 = vld [vmem:[%s399 + $0x30] sm:$0xff]
        %v507 = vld [vmem:[%s399 + $0x38] sm:$0xff]
        %v508 = vld [vmem:[%s399 + $0x40] sm:$0xff]
        %v509 = vld [vmem:[%s399 + $0x48] sm:$0xff]
        %v510 = vld [vmem:[%s399 + $0x50] sm:$0xff]
        %v511 = vld [vmem:[%s399 + $0x58] sm:$0xff]
        %v512 = vld [vmem:[%s399 + $0x60] sm:$0xff]
        %v513 = vld [vmem:[%s399 + $0x68] sm:$0xff]
        %v514 = vld [vmem:[%s399 + $0x70] sm:$0xff]
        %v515 = vld [vmem:[%s399 + $0x78] sm:$0xff]
        %vm516 = vcmp.lt.f32.partialorder %v500, 1.0
        %vm517 = vcmp.lt.f32.partialorder %v501, 1.0
        %vm518 = vcmp.lt.f32.partialorder %v502, 1.0
        %vm519 = vcmp.lt.f32.partialorder %v503, 1.0
        %vm520 = vcmp.lt.f32.partialorder %v504, 1.0
        %vm521 = vcmp.lt.f32.partialorder %v505, 1.0
        %vm522 = vcmp.lt.f32.partialorder %v506, 1.0
        %vm523 = vcmp.lt.f32.partialorder %v507, 1.0
        %vm524 = vcmp.lt.f32.partialorder %v508, 1.0
        %vm525 = vcmp.lt.f32.partialorder %v509, 1.0
        %vm526 = vcmp.lt.f32.partialorder %v510, 1.0
        %vm527 = vcmp.lt.f32.partialorder %v511, 1.0
        %vm528 = vcmp.lt.f32.partialorder %v512, 1.0
        %vm529 = vcmp.lt.f32.partialorder %v513, 1.0
        %vm530 = vcmp.lt.f32.partialorder %v514, 1.0
        %vm531 = vcmp.lt.f32.partialorder %v515, 1.0
        %v532 = vsub.f32 %v468, %v484
        %v533 = vsub.f32 %v469, %v485
        %v534 = vsub.f32 %v470, %v486
        %v535 = vsub.f32 %v471, %v487
        %v536 = vsub.f32 %v472, %v488
        %v537 = vsub.f32 %v473, %v489
        %v538 = vsub.f32 %v474, %v490
        %v539 = vsub.f32 %v475, %v491
        %v540 = vsub.f32 %v476, %v492
        %v541 = vsub.f32 %v477, %v493
        %v542 = vsub.f32 %v478, %v494
        %v543 = vsub.f32 %v479, %v495
        %v544 = vsub.f32 %v480, %v496
        %v545 = vsub.f32 %v481, %v497
        %v546 = vsub.f32 %v482, %v498
        %v547 = vsub.f32 %v483, %v499
        %v548 = vsel %vm516, %v532, 0.0
        %v549 = vsel %vm517, %v533, 0.0
        %v550 = vsel %vm518, %v534, 0.0
        %v551 = vsel %vm519, %v535, 0.0
        %v552 = vsel %vm520, %v536, 0.0
        %v553 = vsel %vm521, %v537, 0.0
        %v554 = vsel %vm522, %v538, 0.0
        %v555 = vsel %vm523, %v539, 0.0
        %v556 = vsel %vm524, %v540, 0.0
        %v557 = vsel %vm525, %v541, 0.0
        %v558 = vsel %vm526, %v542, 0.0
        %v559 = vsel %vm527, %v543, 0.0
        %v560 = vsel %vm528, %v544, 0.0
        %v561 = vsel %vm529, %v545, 0.0
        %v562 = vsel %vm530, %v546, 0.0
        %v563 = vsel %vm531, %v547, 0.0
        %v564 = vld [vmem:[#allocation2] sm:$0xff]
        %v565 = vld [vmem:[#allocation2 + $0x8] sm:$0xff]
        %v566 = vmul.f32 %v548, %v548
        %v567 = vmul.f32 %v549, %v549
        %v568 = vmul.f32 %v550, %v550
        %v569 = vmul.f32 %v551, %v551
        %v570 = vmul.f32 %v552, %v552
        %v571 = vmul.f32 %v553, %v553
        %v572 = vmul.f32 %v554, %v554
        %v573 = vmul.f32 %v555, %v555
        %v574 = vmul.f32 %v556, %v556
        %v575 = vmul.f32 %v557, %v557
        %v576 = vmul.f32 %v558, %v558
        %v577 = vmul.f32 %v559, %v559
        %v578 = vmul.f32 %v560, %v560
        %v579 = vmul.f32 %v561, %v561
        %v580 = vmul.f32 %v562, %v562
        %v581 = vmul.f32 %v563, %v563
        %vm582 = vcmask 130048
        %v583 = vsel %vm582, %v566, 0.0
        %v584 = vsel %vm582, %v568, 0.0
        %v585 = vadd.f32 %v583, %v584
        %v586 = vsel %vm582, %v570, 0.0
        %v587 = vadd.f32 %v585, %v586
        %v588 = vsel %vm582, %v572, 0.0
        %v589 = vadd.f32 %v587, %v588
        %v590 = vsel %vm582, %v574, 0.0
        %v591 = vadd.f32 %v589, %v590
        %v592 = vsel %vm582, %v576, 0.0
        %v593 = vadd.f32 %v591, %v592
        %v594 = vsel %vm582, %v578, 0.0
        %v595 = vadd.f32 %v593, %v594
        %v596 = vsel %vm582, %v580, 0.0
        %v597 = vadd.f32 %v595, %v596
        %v598 = vsel %vm582, %v567, 0.0
        %v599 = vsel %vm582, %v569, 0.0
        %v600 = vadd.f32 %v598, %v599
        %v601 = vsel %vm582, %v571, 0.0
        %v602 = vadd.f32 %v600, %v601
        %v603 = vsel %vm582, %v573, 0.0
        %v604 = vadd.f32 %v602, %v603
        %v605 = vsel %vm582, %v575, 0.0
        %v606 = vadd.f32 %v604, %v605
        %v607 = vsel %vm582, %v577, 0.0
        %v608 = vadd.f32 %v606, %v607
        %v609 = vsel %vm582, %v579, 0.0
        %v610 = vadd.f32 %v608, %v609
        %v611 = vsel %vm582, %v581, 0.0
        %v612 = vadd.f32 %v610, %v611
        %v613 = vadd.f32 %v564, %v597
        %v614 = vadd.f32 %v565, %v612
        %615 = vst.msk [vmem:[#allocation2] sm:$0xff] %vm582, %v613
        %616 = vst.msk [vmem:[#allocation2 + $0x8] sm:$0xff] %vm582, %v614
        %v617 = vld [vmem:[#allocation3] sm:$0xff]
        %v618 = vld [vmem:[#allocation3 + $0x8] sm:$0xff]
        %v619 = vsel %vm516, 1, 0
        %v620 = vsel %vm517, 1, 0
        %v621 = vsel %vm518, 1, 0
        %v622 = vsel %vm519, 1, 0
        %v623 = vsel %vm520, 1, 0
        %v624 = vsel %vm521, 1, 0
        %v625 = vsel %vm522, 1, 0
        %v626 = vsel %vm523, 1, 0
        %v627 = vsel %vm524, 1, 0
        %v628 = vsel %vm525, 1, 0
        %v629 = vsel %vm526, 1, 0
        %v630 = vsel %vm527, 1, 0
        %v631 = vsel %vm528, 1, 0
        %v632 = vsel %vm529, 1, 0
        %v633 = vsel %vm530, 1, 0
        %v634 = vsel %vm531, 1, 0
        %v635 = vcvt.s32.f32 %v619
        %v636 = vcvt.s32.f32 %v620
        %v637 = vcvt.s32.f32 %v621
        %v638 = vcvt.s32.f32 %v622
        %v639 = vcvt.s32.f32 %v623
        %v640 = vcvt.s32.f32 %v624
        %v641 = vcvt.s32.f32 %v625
        %v642 = vcvt.s32.f32 %v626
        %v643 = vcvt.s32.f32 %v627
        %v644 = vcvt.s32.f32 %v628
        %v645 = vcvt.s32.f32 %v629
        %v646 = vcvt.s32.f32 %v630
        %v647 = vcvt.s32.f32 %v631
        %v648 = vcvt.s32.f32 %v632
        %v649 = vcvt.s32.f32 %v633
        %v650 = vcvt.s32.f32 %v634
        %v651 = vsel %vm582, %v635, 0.0
        %v652 = vsel %vm582, %v637, 0.0
        %v653 = vadd.f32 %v651, %v652
        %v654 = vsel %vm582, %v639, 0.0
        %v655 = vadd.f32 %v653, %v654
        %v656 = vsel %vm582, %v641, 0.0
        %v657 = vadd.f32 %v655, %v656
        %v658 = vsel %vm582, %v643, 0.0
        %v659 = vadd.f32 %v657, %v658
        %v660 = vsel %vm582, %v645, 0.0
        %v661 = vadd.f32 %v659, %v660
        %v662 = vsel %vm582, %v647, 0.0
        %v663 = vadd.f32 %v661, %v662
        %v664 = vsel %vm582, %v649, 0.0
        %v665 = vadd.f32 %v663, %v664
        %v666 = vsel %vm582, %v636, 0.0
        %v667 = vsel %vm582, %v638, 0.0
        %v668 = vadd.f32 %v666, %v667
        %v669 = vsel %vm582, %v640, 0.0
        %v670 = vadd.f32 %v668, %v669
        %v671 = vsel %vm582, %v642, 0.0
        %v672 = vadd.f32 %v670, %v671
        %v673 = vsel %vm582, %v644, 0.0
        %v674 = vadd.f32 %v672, %v673
        %v675 = vsel %vm582, %v646, 0.0
        %v676 = vadd.f32 %v674, %v675
        %v677 = vsel %vm582, %v648, 0.0
        %v678 = vadd.f32 %v676, %v677
        %v679 = vsel %vm582, %v650, 0.0
        %v680 = vadd.f32 %v678, %v679
        %v681 = vadd.f32 %v617, %v665
        %v682 = vadd.f32 %v618, %v680
        %683 = vst.msk [vmem:[#allocation3] sm:$0xff] %vm582, %v681
        %684 = vst.msk [vmem:[#allocation3 + $0x8] sm:$0xff] %vm582, %v682
        // Predicated region
        $region57: #{tpu_custom_call.1} parent=35 // pred_check
          %p685 = pneg %p459
        $region58: #{tpu_custom_call.1} parent=35 // pred_check_branch
          %687 = sbr.rel (%p685) target = $region60
        $region59: #{tpu_custom_call.1} parent=35 // pred_region
          %v688 = vld [vmem:[#allocation2] sm:$0xff]
          %v689 = vld [vmem:[#allocation2 + $0x8] sm:$0xff]
          %v690 = vld [vmem:[#allocation3] sm:$0xff]
          %v691 = vld [vmem:[#allocation3 + $0x8] sm:$0xff]
          %v692 = vadd.f32 %v690, 1e-08
          %v693 = vadd.f32 %v691, 1e-08
          %v694 = vrcp.pop %v692
          %v695 = vmul.f32 %v692, %v694
          %v696 = vsub.f32 1.0, %v695
          %v697 = vmul.f32 %v694, %v696
          %v698 = vadd.f32 %v694, %v697
          %vm699 = vweird.f32 %v692
          %vm700 = vweird.f32 %v694
          %vm701 = vmor %vm699, %vm700
          %v702 = vsel %vm701, %v694, %v698
          %v703 = vand.u32 2147483647, %v692
          %vm704 = vcmp.eq.f32.partialorder %v703, 8.507059e+37
          %v705 = vand.u32 %v692, 2147483648
          %v706 = vor.u32 1.1754944e-38, %v705
          %v707 = vsel %vm704, %v706, %v702
          %v708 = vmul.f32 %v688, %v707
          %v709 = vrcp.pop %v693
          %v710 = vmul.f32 %v693, %v709
          %v711 = vsub.f32 1.0, %v710
          %v712 = vmul.f32 %v709, %v711
          %v713 = vadd.f32 %v709, %v712
          %vm714 = vweird.f32 %v693
          %vm715 = vweird.f32 %v709
          %vm716 = vmor %vm714, %vm715
          %v717 = vsel %vm716, %v709, %v713
          %v718 = vand.u32 2147483647, %v693
          %vm719 = vcmp.eq.f32.partialorder %v718, 8.507059e+37
          %v720 = vand.u32 %v693, 2147483648
          %v721 = vor.u32 1.1754944e-38, %v720
          %v722 = vsel %vm719, %v721, %v717
          %v723 = vmul.f32 %v689, %v722
          %v724 = vld [vmem:[%s409] sm:$0xff]
          %v725 = vld [vmem:[%s409 + $0x8] sm:$0xff]
          %vm726 = vcmp.ge.f32.partialorder %v724, 20.0
          %vm727 = vcmp.ge.f32.partialorder %v725, 20.0
          %vm728 = vcmp.le.f32.partialorder %v724, 80.0
          %vm729 = vcmp.le.f32.partialorder %v725, 80.0
          %vm730 = vmand %vm726, %vm728
          %vm731 = vmand %vm727, %vm729
          %v732 = vsel %vm730, 1, 0
          %v733 = vsel %vm731, 1, 0
          %v734 = vcvt.s32.f32 %v732
          %v735 = vcvt.s32.f32 %v733
          %v736 = vmul.f32 %v708, %v734
          %v737 = vmul.f32 %v723, %v735
          %v738 = vsel %vm582, %v736, 0.0
          %v739 = vsel %vm582, %v737, 0.0
          %v740 = vadd.f32 %v738, %v739
          %741 = vadd.xlane.f32.xlu0 %v740
          %v742 = vpop.xlane.xlu0 %741
          %v743 = vrot.slane %v742, 4
          %v744 = vadd.f32 %v742, %v743
          %v745 = vrot.slane %v744, 2
          %v746 = vadd.f32 %v744, %v745
          %v747 = vrot.slane %v746, 1
          %v748 = vadd.f32 %v746, %v747
          %s749 = vtos %v748
          %v750 = vsel %vm582, %v734, 0.0
          %v751 = vsel %vm582, %v735, 0.0
          %v752 = vadd.f32 %v750, %v751
          %753 = vadd.xlane.f32.xlu0 %v752
          %v754 = vpop.xlane.xlu0 %753
          %v755 = vrot.slane %v754, 4
          %v756 = vadd.f32 %v754, %v755
          %v757 = vrot.slane %v756, 2
          %v758 = vadd.f32 %v756, %v757
          %v759 = vrot.slane %v758, 1
          %v760 = vadd.f32 %v758, %v759
          %s761 = vtos %v760
          %v762 = vstv %s749
          %763 = vst [vmem:[%s449] sm:$0x1] %v762
          %v764 = vstv %s761
          %765 = vst [vmem:[%s449 + $0x1] sm:$0x1] %v764
        $region60: #{tpu_custom_call.1} parent=35 // pred_fallthru
          _
        %s766 = sand.u32 %s178, 1
        %s767 = scalar_lea.sflag [#allocation6], %s766
        %s768 = sand.u32 %s178, 1
        %s769 = smul.addr %s768, 2
        %s770 = scalar_lea.vmem [#allocation12], %s769
        // Predicated region
        $region61: #{tpu_custom_call.1} parent=35 // pred_check
          %p771 = pneg %p188
        $region62: #{tpu_custom_call.1} parent=35 // pred_check_branch
          %773 = sbr.rel (%p771) target = $region64
        $region63: #{tpu_custom_call.1} parent=35 // pred_region
          %775 = vsyncadd %s767, 0
          %s776 = sadd.s32 %s33, %s32
          %s777 = smul.addr %s776, 2
          %s778 = scalar_lea.hbm %s4, %s777
          %s780 = sshll.u32 %s770, 4
          %s781 = int_to_ptr.vmem [resolvable:$true] %s780
          %s782 = sshll.u32 %s778, 4
          %s783 = int_to_ptr.hbm [resolvable:$true] %s782
          %785 = dma.vmem_to_hbm [thread:$0]  %s781, 32, %s783, %s767
        $region64: #{tpu_custom_call.1} parent=35 // pred_fallthru
          _
      $region36: #{tpu_custom_call.1} parent=5 // pred_fallthru
        _
      %p786 = scmp.le.s32.totalorder 2, %s22
      // Predicated region
      $region65: #{tpu_custom_call.1} parent=5 // pred_check
        %p787 = pneg %p786
      $region66: #{tpu_custom_call.1} parent=5 // pred_check_branch
        %789 = sbr.rel (%p787) target = $region68
      $region67: #{tpu_custom_call.1} parent=5 // pred_region
        %s790 = ssub.s32 %s22, 2
        // Predicated region
        $region69: #{tpu_custom_call.1} parent=67 // pred_check
          %p791 = pneg %p194
        $region70: #{tpu_custom_call.1} parent=67 // pred_check_branch
          %793 = sbr.rel (%p791) target = $region72
        $region71: #{tpu_custom_call.1} parent=67 // pred_region
          %s794 = sand.u32 %s179, 1
          %s795 = scalar_lea.sflag [#allocation6], %s794
          %s796 = sand.u32 %s179, 1
          %s797 = smul.addr %s796, 2
          %s798 = scalar_lea.vmem [#allocation12], %s797
          %800 = dma.done %s795, 32
        $region72: #{tpu_custom_call.1} parent=67 // pred_fallthru
          _
      $region68: #{tpu_custom_call.1} parent=5 // pred_fallthru
        _
    $region6: #{tpu_custom_call.1} parent=1 // loop_footer
      %s26 = sadd.s32 1, %s22
    $region7: #{tpu_custom_call.1} parent=1 // loop_footer_branch
      %21 = sbr.rel target = $region3
    $region8: #{tpu_custom_call.1} parent=1 // loop_exit
      _
    %801 = vsyncpa [#allocation5], 1
    %s802 = scalar_lea.sflag [#allocation5], 1
    %803 = vsyncpa %s802, 1
    %804 = vsyncpa [#allocation8], 1
    %s805 = scalar_lea.sflag [#allocation8], 1
    %806 = vsyncpa %s805, 1
    %807 = vsyncpa [#allocation11], 1
    %s808 = scalar_lea.sflag [#allocation11], 1
    %809 = vsyncpa %s808, 1
    %810 = vsyncpa [#allocation6], 1
    %s811 = scalar_lea.sflag [#allocation6], 1
    %812 = vsyncpa %s811, 1

</llo_original>
